<compile_context>
chip_gen: v7x
topology: tpu7x:2x2x1
jax: 0.10.0
libtpu: 0.0.40
codegen_flags: <defaults>
</compile_context>

<pallas_src>
import math

import jax
import jax.numpy as jnp
from jax import lax
from jax.experimental import pallas as pl
from jax.experimental.pallas import tpu as pltpu


def _round_up(a, b):
    return -(-a // b) * b


def _skip_first_kernel(x_ref, w_ref, b_ref, o_ref):
    # x_ref: (TM, D)   w_ref: (H, K=D-1)   b_ref: (1, H)   o_ref: (TM, 1+H)
    H, K = w_ref.shape
    sec = x_ref[:, pl.ds(1, K)]                       # (TM, K), lane shift in VMEM
    y = lax.dot_general(
        sec, w_ref[...],
        dimension_numbers=(((1,), (1,)), ((), ())),   # contract K vs K on the MXU
        preferred_element_type=jnp.float32,
    )
    o_ref[:, 0:1] = x_ref[:, 0:1]                     # exact passthrough of column 0
    o_ref[:, pl.ds(1, H)] = (y + b_ref[...]).astype(o_ref.dtype)


def skip_first_layer(x, weight, bias, *, tm=512):
    """x: (..., D), weight: (H, D-1) [PyTorch nn.Linear layout], bias: (H,)."""
    *lead, D = x.shape
    H, K = weight.shape
    assert K == D - 1, "inner Linear must take D-1 features"
    M = math.prod(lead) if lead else 1

    x2 = x.reshape(M, D)
    b2 = bias.reshape(1, H)

    # ---- tile selection -----------------------------------------------------
    tm = max(8, (tm // 8) * 8)                        # sublane rule: TM % 8 == 0
    if M > tm:
        TM = tm
    else:
        # Give the grid >= 2 steps when possible so the "parallel" axis can be
        # sharded across v7x's two TensorCores; otherwise use the full extent.
        half = _round_up(pl.cdiv(M, 2), 8)
        TM = half if half < M else M
    grid = (pl.cdiv(M, TM),)

    # ---- VMEM budget (lane-padded, double-buffered) -------------------------
    itemsize = jnp.dtype(x.dtype).itemsize
    x_tile = _round_up(TM, 8) * _round_up(D, 128) * itemsize
    o_tile = _round_up(TM, 8) * _round_up(1 + H, 128) * itemsize
    w_buf = _round_up(H, 8) * _round_up(K, 128) * itemsize
    b_buf = 8 * _round_up(H, 128) * itemsize

    big_w = w_buf > (8 << 20)
    w_bufs = 1 if big_w else 2
    vmem_need = 2 * (x_tile + o_tile) + w_bufs * w_buf + 2 * b_buf
    # >= scoped default, <= 48 MiB (safe on v7x's 64 MiB/TC; trivially fine on
    # v5e/v6e's 128 MiB).
    vmem_limit = int(min(max(2 * vmem_need, 32 << 20), 48 << 20))

    if big_w:
        w_spec = pl.BlockSpec((H, K), lambda i: (0, 0), pipeline_mode=pl.Buffered(1))
        b_spec = pl.BlockSpec((1, H), lambda i: (0, 0), pipeline_mode=pl.Buffered(1))
    else:
        w_spec = pl.BlockSpec((H, K), lambda i: (0, 0))    # resident weights
        b_spec = pl.BlockSpec((1, H), lambda i: (0, 0))    # resident bias

    bytes_accessed = (
        _round_up(M, 8) * (_round_up(D, 128) + _round_up(1 + H, 128)) * itemsize
        + w_buf + b_buf
    )

    out2 = pl.pallas_call(
        _skip_first_kernel,
        out_shape=jax.ShapeDtypeStruct((M, 1 + H), x.dtype),
        grid_spec=pltpu.PrefetchScalarGridSpec(
            num_scalar_prefetch=0,
            grid=grid,
            in_specs=[
                pl.BlockSpec((TM, D), lambda i: (i, 0)),   # streamed full-x row tiles
                w_spec,
                b_spec,
            ],
            out_specs=pl.BlockSpec((TM, 1 + H), lambda i: (i, 0)),
        ),
        compiler_params=pltpu.CompilerParams(
            dimension_semantics=("parallel",),
            vmem_limit_bytes=vmem_limit,
        ),
        cost_estimate=pl.CostEstimate(
            flops=2 * M * K * H,
            transcendentals=0,
            bytes_accessed=int(bytes_accessed),
        ),
    )(x2, weight, b2)

    return out2.reshape(*lead, 1 + H)


def _reference(x, weight, bias):
    first = x[..., 0:1]
    sec = x[..., 1:]
    y = jnp.einsum("...d,hd->...h", sec, weight) + bias
    return jnp.concatenate([first, y], axis=-1)


if __name__ == "__main__":
    key = jax.random.PRNGKey(0)
    k_x, k_w, k_b = jax.random.split(key, 3)

    B, S, D = 2, 8, 33          # x last dim = 33 -> sec has 32 features
    H = 32                      # inner Linear: 32 -> 32

    x = jax.random.normal(k_x, (B, S, D), dtype=jnp.float32)
    # Deterministic nn.Linear-style params (uniform, like PyTorch init).
    bound = 1.0 / jnp.sqrt(jnp.float32(D - 1))
    weight = jax.random.uniform(k_w, (H, D - 1), jnp.float32, -bound, bound)
    bias = jax.random.uniform(k_b, (H,), jnp.float32, -bound, bound)

    out = skip_first_layer(x, weight, bias)
    out = jax.block_until_ready(out)

    ref = _reference(x, weight, bias)
    assert out.shape == (B, S, 1 + H), out.shape
    assert jnp.allclose(out, ref, atol=1e-5, rtol=1e-5), "mismatch vs reference"
    # first feature must be passed through untouched
    assert jnp.array_equal(out[..., 0], x[..., 0])

    # Second, ragged shape: M = 15 rows -> grid of 2 with a masked trailing tile.
    x_odd = jax.random.normal(k_x, (3, 5, D), dtype=jnp.float32)
    out_odd = jax.block_until_ready(skip_first_layer(x_odd, weight, bias))
    ref_odd = _reference(x_odd, weight, bias)
    assert out_odd.shape == (3, 5, 1 + H), out_odd.shape
    assert jnp.allclose(out_odd, ref_odd, atol=1e-5, rtol=1e-5), "mismatch (ragged)"
    assert jnp.array_equal(out_odd[..., 0], x_odd[..., 0])

    print("KERNEL_OK")
</pallas_src>

<mosaic_0001>
module attributes {stable_mosaic.version = 11 : i64} {
  func.func @_skip_first_kernel(%arg0: i32, %arg1: memref<8x33xf32, #tpu.memory_space<vmem>>, %arg2: memref<32x32xf32, #tpu.memory_space<vmem>>, %arg3: memref<1x32xf32, #tpu.memory_space<vmem>>, %arg4: memref<8x33xf32, #tpu.memory_space<vmem>>) attributes {dimension_semantics = [#tpu.dimension_semantics<parallel>], iteration_bounds = array<i64: 2>, scalar_prefetch = 0 : i64, scratch_operands = 0 : i64, tpu.core_type = #tpu.core_type<tc>, window_params = [{transform_indices = @transform_0, window_bounds = array<i64: 8, 33>}, {pipeline_mode = #tpu.pipeline_mode<synchronous>, transform_indices = @transform_1, window_bounds = array<i64: 32, 32>}, {pipeline_mode = #tpu.pipeline_mode<synchronous>, transform_indices = @transform_2, window_bounds = array<i64: 1, 32>}, {transform_indices = @transform_3, window_bounds = array<i64: 8, 33>}]} {
    %c0 = arith.constant 0 : index
    %c1 = arith.constant 1 : index
    %0 = vector.load %arg1[%c0, %c1] : memref<8x33xf32, #tpu.memory_space<vmem>>, vector<8x32xf32>
    %c0_0 = arith.constant 0 : index
    %c0_1 = arith.constant 0 : index
    %1 = vector.load %arg2[%c0_0, %c0_1] : memref<32x32xf32, #tpu.memory_space<vmem>>, vector<32x32xf32>
    %cst = arith.constant dense<0.000000e+00> : vector<8x32xf32>
    %2 = tpu.matmul %0, %1, %cst {dimension_numbers = #tpu.dot_dimension_numbers<[1], [1], [0], [0], [0, 0, 1, 0], [], []>} : vector<8x32xf32>, vector<32x32xf32>, vector<8x32xf32> -> vector<8x32xf32>
    %c0_2 = arith.constant 0 : index
    %c0_3 = arith.constant 0 : index
    %3 = vector.load %arg1[%c0_2, %c0_3] : memref<8x33xf32, #tpu.memory_space<vmem>>, vector<8x1xf32>
    %c0_4 = arith.constant 0 : index
    %c0_5 = arith.constant 0 : index
    %4 = vector.load %arg4[%c0_4, %c0_5] : memref<8x33xf32, #tpu.memory_space<vmem>>, vector<8x1xf32>
    tpu.vector_store %arg4[%c0_4, %c0_5], %3 {strides = array<i32>} : memref<8x33xf32, #tpu.memory_space<vmem>>, vector<8x1xf32>,
    %c0_6 = arith.constant 0 : index
    %c0_7 = arith.constant 0 : index
    %5 = vector.load %arg3[%c0_6, %c0_7] : memref<1x32xf32, #tpu.memory_space<vmem>>, vector<1x32xf32>
    %6 = vector.broadcast %5 : vector<1x32xf32> to vector<8x32xf32>
    %7 = arith.addf %2, %6 : vector<8x32xf32>
    %c0_8 = arith.constant 0 : index
    %c1_9 = arith.constant 1 : index
    %8 = vector.load %arg4[%c0_8, %c1_9] : memref<8x33xf32, #tpu.memory_space<vmem>>, vector<8x32xf32>
    tpu.vector_store %arg4[%c0_8, %c1_9], %7 {strides = array<i32>} : memref<8x33xf32, #tpu.memory_space<vmem>>, vector<8x32xf32>,
    return
  }
  func.func @transform_0(%arg0: i32) -> (i32, i32) {
    %c0_i32 = arith.constant 0 : i32
    %c0_i32_0 = arith.constant 0 : i32
    return %arg0, %c0_i32 : i32, i32
  }
  func.func @transform_1(%arg0: i32) -> (i32, i32) {
    %c0_i32 = arith.constant 0 : i32
    %c0_i32_0 = arith.constant 0 : i32
    %c0_i32_1 = arith.constant 0 : i32
    return %c0_i32, %c0_i32_0 : i32, i32
  }
  func.func @transform_2(%arg0: i32) -> (i32, i32) {
    %c0_i32 = arith.constant 0 : i32
    %c0_i32_0 = arith.constant 0 : i32
    %c0_i32_1 = arith.constant 0 : i32
    return %c0_i32, %c0_i32_0 : i32, i32
  }
  func.func @transform_3(%arg0: i32) -> (i32, i32) {
    %c0_i32 = arith.constant 0 : i32
    %c0_i32_0 = arith.constant 0 : i32
    return %arg0, %c0_i32 : i32, i32
  }
}

</mosaic_0001>

<llo_original>
// kernel: tpu_custom_call.1
$region0: #{tpu_custom_call.1}
  #allocation0 [shape = 'u32[]', space=smem, size = 0x4, offset = 0x4, fixed_abs, tag = 'smem constant byte address 0x4 - core index']
  #allocation1 [shape = 'u32[144,128]{1,0:T(1,128)}', space=vmem, size = 0x12000, scoped, tag = 'internal scratch']
  %s0 = inlined_call_operand.hbm [shape: f32[16,33], index: 0, kind: input, shape index: {}]
  %s1 = inlined_call_operand.hbm [shape: f32[32,32], index: 1, kind: input, shape index: {}]
  %s2 = inlined_call_operand.vmem [shape: f32[1,32], index: 2, kind: input, shape index: {}]
  %s3 = inlined_call_operand.hbm [shape: f32[16,33], index: 3, kind: output, shape index: {}]
  %s4 = sld [smem:[#allocation0]]
  $region53: #{tpu_custom_call.1} parent=0
    _
  %s6 = ssub.s32 1, %s4
  %s7 = scalar_select 0, %s6, %s4
  $region1: #{tpu_custom_call.1} parent=0
    #allocation2 [shape = 'u8[8192]{0}', space=vmem, size = 0x2000, scoped, tag = 'input window, operand 0']
    #allocation3 [shape = 's32[2]{0}', space=sflag, size = 0x8, scoped, tag = 'scoped memory for tpu_custom_call.1']
    #allocation4 [shape = 's32[2]{0}', space=sflag, size = 0x8, scoped, tag = 'scoped memory for tpu_custom_call.1']
    #allocation5 [shape = 'u8[16384]{0}', space=vmem, size = 0x4000, scoped, tag = 'input window, operand 1, single buffered']
    #allocation6 [shape = 's32[1]{0}', space=sflag, size = 0x4, scoped, tag = 'scoped memory for tpu_custom_call.1']
    #allocation7 [shape = 'u8[8192]{0}', space=vmem, size = 0x2000, scoped, tag = 'output window, operand 0']
    %8 = vsyncpa [#allocation3], 0
    %s9 = scalar_lea.sflag [#allocation3], 1
    %10 = vsyncpa %s9, 0
    %11 = vsyncpa [#allocation6], 0
    %12 = vsyncpa [#allocation4], 0
    %s13 = scalar_lea.sflag [#allocation4], 1
    %14 = vsyncpa %s13, 0
    loop: start=0, step=1, limit=4
    $region2: #{tpu_custom_call.1} parent=1 // loop_pre_header
      _
    $region3: #{tpu_custom_call.1} parent=1 // loop_header
      %s16 = sphi 0, %s20
      %p17 = scmp.ge.s32.totalorder %s16, 4
      %s26 = sphi 0, %s28
      %s29 = sphi 0, %s26
      %s30 = sphi 0, %s29
      %s46 = sphi 0, %s30
      %s50 = sphi 0, %s50
      %s52 = sphi 0, %s50
      %s53 = sphi 0, %s52
      %s67 = sphi 0, %s53
      %s71 = sphi 0, %s71
      %s73 = sphi 0, %s71
      %s74 = sphi 0, %s73
      %s88 = sphi 0, %s74
      %s94 = sphi 0, %s96
      %s97 = sphi 0, %s94
      %s98 = sphi 0, %s97
      %s114 = sphi 0, %s98
    $region4: #{tpu_custom_call.1} parent=1 // loop_header_branch
      %19 = sbr.rel (%p17) target = $region8
    $region5: #{tpu_custom_call.1} parent=1 // loop_body
      %s21 = ssub.s32 %s16, 1
      %s22 = ssub.s32 %s16, 2
      %s23 = sadd.s32 %s16, 1
      %s24 = ssub.s32 %s16, %s23
      %p25 = scmp.eq.s32.totalorder %s24, 0
      %s27 = sadd.s32 %s26, 1
      %s28 = scalar_select %p25, %s26, %s27
      %p31 = pneg %p25
      %p32 = scmp.eq.s32.totalorder %s16, 1
      %p33 = por %p31, %p32
      %p34 = scmp.ne.s32.totalorder %s26, %s29
      %p35 = scmp.eq.s32.totalorder %s16, 0
      %p36 = por %p34, %p35
      %p37 = scmp.ne.s32.totalorder %s26, %s29
      %p38 = scmp.eq.s32.totalorder %s21, 1
      %p39 = por %p37, %p38
      %p40 = scmp.ne.s32.totalorder %s29, %s30
      %p41 = scmp.eq.s32.totalorder %s21, 0
      %p42 = por %p40, %p41
      %p43 = scmp.ne.s32.totalorder %s29, %s30
      %p44 = scmp.eq.s32.totalorder %s22, 1
      %p45 = por %p43, %p44
      %p47 = scmp.ne.s32.totalorder %s30, %s46
      %p48 = scmp.eq.s32.totalorder %s22, 0
      %p49 = por %p47, %p48
      %s51 = sadd.s32 %s50, 1
      %p54 = scmp.eq.s32.totalorder %s16, 1
      %p55 = scmp.ne.s32.totalorder %s50, %s52
      %p56 = scmp.eq.s32.totalorder %s16, 0
      %p57 = por %p55, %p56
      %p58 = scmp.ne.s32.totalorder %s50, %s52
      %p59 = scmp.eq.s32.totalorder %s21, 1
      %p60 = por %p58, %p59
      %p61 = scmp.ne.s32.totalorder %s52, %s53
      %p62 = scmp.eq.s32.totalorder %s21, 0
      %p63 = por %p61, %p62
      %p64 = scmp.ne.s32.totalorder %s52, %s53
      %p65 = scmp.eq.s32.totalorder %s22, 1
      %p66 = por %p64, %p65
      %p68 = scmp.ne.s32.totalorder %s53, %s67
      %p69 = scmp.eq.s32.totalorder %s22, 0
      %p70 = por %p68, %p69
      %s72 = sadd.s32 %s71, 1
      %p75 = scmp.eq.s32.totalorder %s16, 1
      %p76 = scmp.ne.s32.totalorder %s71, %s73
      %p77 = scmp.eq.s32.totalorder %s16, 0
      %p78 = por %p76, %p77
      %p79 = scmp.ne.s32.totalorder %s71, %s73
      %p80 = scmp.eq.s32.totalorder %s21, 1
      %p81 = por %p79, %p80
      %p82 = scmp.ne.s32.totalorder %s73, %s74
      %p83 = scmp.eq.s32.totalorder %s21, 0
      %p84 = por %p82, %p83
      %p85 = scmp.ne.s32.totalorder %s73, %s74
      %p86 = scmp.eq.s32.totalorder %s22, 1
      %p87 = por %p85, %p86
      %p89 = scmp.ne.s32.totalorder %s74, %s88
      %p90 = scmp.eq.s32.totalorder %s22, 0
      %p91 = por %p89, %p90
      %s92 = ssub.s32 %s16, %s23
      %p93 = scmp.eq.s32.totalorder %s92, 0
      %s95 = sadd.s32 %s94, 1
      %s96 = scalar_select %p93, %s94, %s95
      %p99 = pneg %p93
      %p100 = scmp.eq.s32.totalorder %s16, 1
      %p101 = por %p99, %p100
      %p102 = scmp.ne.s32.totalorder %s94, %s97
      %p103 = scmp.eq.s32.totalorder %s16, 0
      %p104 = por %p102, %p103
      %p105 = scmp.ne.s32.totalorder %s94, %s97
      %p106 = scmp.eq.s32.totalorder %s21, 1
      %p107 = por %p105, %p106
      %p108 = scmp.ne.s32.totalorder %s97, %s98
      %p109 = scmp.eq.s32.totalorder %s21, 0
      %p110 = por %p108, %p109
      %p111 = scmp.ne.s32.totalorder %s97, %s98
      %p112 = scmp.eq.s32.totalorder %s22, 1
      %p113 = por %p111, %p112
      %p115 = scmp.ne.s32.totalorder %s98, %s114
      %p116 = scmp.eq.s32.totalorder %s22, 0
      %p117 = por %p115, %p116
      %p118 = scmp.le.s32.totalorder 1, %s16
      %p119 = scmp.lt.s32.totalorder %s16, 3
      %p120 = pnand %p118, %p119
      %p121 = pneg %p120
      // Predicated region
      $region9: #{tpu_custom_call.1} parent=5 // pred_check
        _
      $region10: #{tpu_custom_call.1} parent=5 // pred_check_branch
        %123 = sbr.rel (%p120) target = $region12
      $region11: #{tpu_custom_call.1} parent=5 // pred_region
        %s124 = ssub.s32 %s16, 1
        // Predicated region
        $region13: #{tpu_custom_call.1} parent=11 // pred_check
          %p125 = pneg %p63
        $region14: #{tpu_custom_call.1} parent=11 // pred_check_branch
          %127 = sbr.rel (%p125) target = $region16
        $region15: #{tpu_custom_call.1} parent=11 // pred_region
          %s129 = ssub.s32 512, 512
          %130 = vsyncadd [#allocation6], %s129
          %s131 = sshll.u32 [#allocation5], 4
          %s132 = int_to_ptr.vmem [resolvable:$true] %s131
          %137 = dma.hbm_to_vmem [thread:$0]  %s1, 512, %s132, [#allocation6], 128, 128, 8
        $region16: #{tpu_custom_call.1} parent=11 // pred_fallthru
          _
        // Predicated region
        $region17: #{tpu_custom_call.1} parent=11 // pred_check
          %p138 = pneg %p84
        $region18: #{tpu_custom_call.1} parent=11 // pred_check_branch
          %140 = sbr.rel (%p138) target = $region20
        $region19: #{tpu_custom_call.1} parent=11 // pred_region
          _
        $region20: #{tpu_custom_call.1} parent=11 // pred_fallthru
          _
      $region12: #{tpu_custom_call.1} parent=5 // pred_fallthru
        _
      %p141 = scmp.lt.s32.totalorder %s16, 2
      // Predicated region
      $region21: #{tpu_custom_call.1} parent=5 // pred_check
        %p142 = pneg %p141
      $region22: #{tpu_custom_call.1} parent=5 // pred_check_branch
        %144 = sbr.rel (%p142) target = $region24
      $region23: #{tpu_custom_call.1} parent=5 // pred_region
        // Predicated region
        $region25: #{tpu_custom_call.1} parent=23 // pred_check
          %p145 = pneg %p36
        $region26: #{tpu_custom_call.1} parent=23 // pred_check_branch
          %147 = sbr.rel (%p145) target = $region28
        $region27: #{tpu_custom_call.1} parent=23 // pred_region
          %s148 = sand.u32 %s26, 1
          %s149 = scalar_lea.sflag [#allocation3], %s148
          %s150 = sand.u32 %s26, 1
          %s151 = smul.addr %s150, 8
          %s152 = scalar_lea.vmem [#allocation2], %s151
          %s154 = ssub.s32 128, 128
          %155 = vsyncadd %s149, %s154
          %s156 = smul.addr %s16, 128
          %s157 = scalar_lea.hbm %s0, %s156
          %s159 = sshll.u32 %s152, 4
          %s160 = int_to_ptr.vmem [resolvable:$true] %s159
          %162 = dma.hbm_to_vmem [thread:$0]  %s157, 128, %s160, %s149
        $region28: #{tpu_custom_call.1} parent=23 // pred_fallthru
          _
      $region24: #{tpu_custom_call.1} parent=5 // pred_fallthru
        _
      %p163 = scmp.le.s32.totalorder 1, %s16
      %p164 = scmp.lt.s32.totalorder %s16, 3
      %p165 = pnand %p163, %p164
      %p166 = pneg %p165
      // Predicated region
      $region29: #{tpu_custom_call.1} parent=5 // pred_check
        _
      $region30: #{tpu_custom_call.1} parent=5 // pred_check_branch
        %168 = sbr.rel (%p165) target = $region32
      $region31: #{tpu_custom_call.1} parent=5 // pred_region
        %s169 = ssub.s32 %s16, 1
        %s170 = sand.u32 %s29, 1
        %s171 = scalar_lea.sflag [#allocation3], %s170
        %s172 = sand.u32 %s29, 1
        %s173 = smul.addr %s172, 8
        %s174 = scalar_lea.vmem [#allocation2], %s173
        // Predicated region
        $region33: #{tpu_custom_call.1} parent=31 // pred_check
          %p175 = pneg %p42
        $region34: #{tpu_custom_call.1} parent=31 // pred_check_branch
          %177 = sbr.rel (%p175) target = $region36
        $region35: #{tpu_custom_call.1} parent=31 // pred_region
          %178 = dma.done %s171, 128
        $region36: #{tpu_custom_call.1} parent=31 // pred_fallthru
          _
        // Predicated region
        $region37: #{tpu_custom_call.1} parent=31 // pred_check
          %p179 = pneg %p63
        $region38: #{tpu_custom_call.1} parent=31 // pred_check_branch
          %181 = sbr.rel (%p179) target = $region40
        $region39: #{tpu_custom_call.1} parent=31 // pred_region
          %182 = dma.done [#allocation6], 512
        $region40: #{tpu_custom_call.1} parent=31 // pred_fallthru
          _
        %s183 = sand.u32 %s29, 1
        %s184 = scalar_lea.sflag [#allocation3], %s183
        %s185 = sand.u32 %s29, 1
        %s186 = smul.addr %s185, 8
        %s187 = scalar_lea.vmem [#allocation2], %s186
        %p188 = pneg %p42
        %p189 = pneg %p39
        %p190 = pneg %p63
        %p191 = pneg %p60
        %p192 = pneg %p84
        %p193 = pneg %p81
        %p194 = pneg %p110
        %p195 = pneg %p107
        %s196 = sand.u32 %s97, 1
        %s197 = scalar_lea.sflag [#allocation4], %s196
        %s198 = sand.u32 %s97, 1
        %s199 = smul.addr %s198, 8
        %s200 = scalar_lea.vmem [#allocation7], %s199
        %v201 = vld [vmem:[%s174] sm:$0xff]
        %v202 = vld [vmem:[#allocation5] sm:$0xff]
        %v203 = vld [vmem:[#allocation5 + $0x8] sm:$0xff]
        %v204 = vld [vmem:[#allocation5 + $0x10] sm:$0xff]
        %v205 = vld [vmem:[#allocation5 + $0x18] sm:$0xff]
        %vm206 = vcmask 7168
        %207 = vst.msk [vmem:[%s200] sm:$0xff] %vm206, %v201
        %v208 = vld [vmem:[%s2] sm:$0x1]
        %v210 = vlaneseq
        %v211 = vshrl.u32 %v210, 7
        %v212 = vsub.s32 0, %v211
        %v213 = vrot.slane %v208, %v212
        %216 = vrot.lane.b32.xlu0 %v201, 127
        %v217 = vpop.permute.xlu0 %216
        %vm218 = vcmask 261120
        %v219 = vsel %vm218, %v217, 0
        %v222 = vsel %vm218, %v202, 0
        %v225 = vsel %vm218, %v203, 0
        %v228 = vsel %vm218, %v204, 0
        %v231 = vsel %vm218, %v205, 0
        %233 = vmatprep.subr.mxu0 0.0
        %234 = vmatpush1.xpose.msra.mxu0 %v222
        %235 = vmatprep.subr.mxu0 0.0
        %236 = vmatpush1.xpose.msra.mxu0 %v225
        %237 = vmatprep.subr.mxu0 0.0
        %238 = vmatpush1.xpose.msra.mxu0 %v228
        %239 = vmatprep.subr.mxu0 0.0
        %240 = vmatpush1.xpose.msra.mxu0 %v231
        %241 = vmatprep.subr.mxu0 0.0
        %242 = vmatpush1.xpose.msra.mxu0 0.0
        %243 = vmatprep.subr.mxu0 0.0
        %244 = vmatpush1.xpose.msra.mxu0 0.0
        %245 = vmatprep.subr.mxu0 0.0
        %246 = vmatpush1.xpose.msra.mxu0 0.0
        %247 = vmatprep.subr.mxu0 0.0
        %248 = vmatpush1.xpose.msra.mxu0 0.0
        %249 = vmatprep.subr.mxu0 0.0
        %250 = vmatpush1.xpose.msra.mxu0 0.0
        %251 = vmatprep.subr.mxu0 0.0
        %252 = vmatpush1.xpose.msra.mxu0 0.0
        %253 = vmatprep.subr.mxu0 0.0
        %254 = vmatpush1.xpose.msra.mxu0 0.0
        %255 = vmatprep.subr.mxu0 0.0
        %256 = vmatpush1.xpose.msra.mxu0 0.0
        %257 = vmatprep.subr.mxu0 0.0
        %258 = vmatpush1.xpose.msra.mxu0 0.0
        %259 = vmatprep.subr.mxu0 0.0
        %260 = vmatpush1.xpose.msra.mxu0 0.0
        %261 = vmatprep.subr.mxu0 0.0
        %262 = vmatpush1.xpose.msra.mxu0 0.0
        %263 = vmatprep.subr.mxu0 0.0
        %264 = vmatpush1.xpose.msra.mxu0 0.0
        %265 = vmatprep.subr.mxu0 0.0
        %266 = vmatpush1.xpose.msra.mxu0 0.0
        %267 = vmatprep.subr.mxu0 0.0
        %268 = vmatpush1.xpose.msra.mxu0 0.0
        %269 = vmatprep.subr.mxu0 0.0
        %270 = vmatpush1.xpose.msra.mxu0 0.0
        %271 = vmatprep.subr.mxu0 0.0
        %272 = vmatpush1.xpose.msra.mxu0 0.0
        %273 = vmatprep.subr.mxu0 0.0
        %274 = vmatpush1.xpose.msra.mxu0 0.0
        %275 = vmatprep.subr.mxu0 0.0
        %276 = vmatpush1.xpose.msra.mxu0 0.0
        %277 = vmatprep.subr.mxu0 0.0
        %278 = vmatpush1.xpose.msra.mxu0 0.0
        %279 = vmatprep.subr.mxu0 0.0
        %280 = vmatpush1.xpose.msra.mxu0 0.0
        %281 = vmatprep.subr.mxu0 0.0
        %282 = vmatpush1.xpose.msra.mxu0 0.0
        %283 = vmatprep.subr.mxu0 0.0
        %284 = vmatpush1.xpose.msra.mxu0 0.0
        %285 = vmatprep.subr.mxu0 0.0
        %286 = vmatpush1.xpose.msra.mxu0 0.0
        %287 = vmatprep.subr.mxu0 0.0
        %288 = vmatpush1.xpose.msra.mxu0 0.0
        %289 = vmatprep.subr.mxu0 0.0
        %290 = vmatpush1.xpose.msra.mxu0 0.0
        %291 = vmatprep.subr.mxu0 0.0
        %292 = vmatpush1.xpose.msra.mxu0 0.0
        %293 = vmatprep.subr.mxu0 0.0
        %294 = vmatpush1.xpose.msra.mxu0 0.0
        %295 = vmatprep.subr.mxu0 0.0
        %296 = vmatpush1.xpose.msra.mxu0 0.0
        %297 = vmatprep.mubr.f32.mxu0 0.0
        %298 = vmatmul.mubr.f32.gmra.mrb[0].mxu0 %v219
        %v299 = vpop.f32.mrb[0].mxu0
        %v300 = vadd.f32 %v213, %v299
        %v301 = vpop.f32.mrb[0].mxu0
        %302 = vdwg.mxu0
        %304 = vrot.lane.b32.xlu0 %v300, 1
        %v305 = vpop.permute.xlu0 %304
        %vm307 = vcmask 269320
        %308 = vst.msk [vmem:[%s200] sm:$0xff] %vm307, %v305
        %s309 = sand.u32 %s97, 1
        %s310 = scalar_lea.sflag [#allocation4], %s309
        %s311 = sand.u32 %s97, 1
        %s312 = smul.addr %s311, 8
        %s313 = scalar_lea.vmem [#allocation7], %s312
        // Predicated region
        $region41: #{tpu_custom_call.1} parent=31 // pred_check
          %p314 = pneg %p107
        $region42: #{tpu_custom_call.1} parent=31 // pred_check_branch
          %316 = sbr.rel (%p314) target = $region44
        $region43: #{tpu_custom_call.1} parent=31 // pred_region
          %s318 = ssub.s32 128, 128
          %319 = vsyncadd %s310, %s318
          %s320 = smul.addr %s21, 128
          %s321 = scalar_lea.hbm %s3, %s320
          %s323 = sshll.u32 %s313, 4
          %s324 = int_to_ptr.vmem [resolvable:$true] %s323
          %326 = dma.vmem_to_hbm [thread:$0]  %s324, 128, %s321, %s310
        $region44: #{tpu_custom_call.1} parent=31 // pred_fallthru
          _
      $region32: #{tpu_custom_call.1} parent=5 // pred_fallthru
        _
      %p327 = scmp.le.s32.totalorder 2, %s16
      // Predicated region
      $region45: #{tpu_custom_call.1} parent=5 // pred_check
        %p328 = pneg %p327
      $region46: #{tpu_custom_call.1} parent=5 // pred_check_branch
        %330 = sbr.rel (%p328) target = $region48
      $region47: #{tpu_custom_call.1} parent=5 // pred_region
        %s331 = ssub.s32 %s16, 2
        // Predicated region
        $region49: #{tpu_custom_call.1} parent=47 // pred_check
          %p332 = pneg %p113
        $region50: #{tpu_custom_call.1} parent=47 // pred_check_branch
          %334 = sbr.rel (%p332) target = $region52
        $region51: #{tpu_custom_call.1} parent=47 // pred_region
          %s335 = sand.u32 %s98, 1
          %s336 = scalar_lea.sflag [#allocation4], %s335
          %s337 = sand.u32 %s98, 1
          %s338 = smul.addr %s337, 8
          %s339 = scalar_lea.vmem [#allocation7], %s338
          %340 = dma.done %s336, 128
        $region52: #{tpu_custom_call.1} parent=47 // pred_fallthru
          _
      $region48: #{tpu_custom_call.1} parent=5 // pred_fallthru
        _
    $region6: #{tpu_custom_call.1} parent=1 // loop_footer
      %s20 = sadd.s32 1, %s16
    $region7: #{tpu_custom_call.1} parent=1 // loop_footer_branch
      %15 = sbr.rel target = $region3
    $region8: #{tpu_custom_call.1} parent=1 // loop_exit
      _
    %341 = vsyncpa [#allocation3], 1
    %s342 = scalar_lea.sflag [#allocation3], 1
    %343 = vsyncpa %s342, 1
    %344 = vsyncpa [#allocation6], 1
    %345 = vsyncpa [#allocation4], 1
    %s346 = scalar_lea.sflag [#allocation4], 1
    %347 = vsyncpa %s346, 1

</llo_original>
